<compile_context>
chip_gen: v6e
topology: v6e:2x2x1
jax: 0.10.0
libtpu: 0.0.40
codegen_flags: <defaults>
</compile_context>

<pallas_src>
import functools

import jax
import jax.numpy as jnp
from jax.experimental import pallas as pl
from jax.experimental.pallas import tpu as pltpu

LRELU_SLOPE = 0.1
KERNEL_SIZE = 3
DILATIONS = (1, 3)


def _leaky_relu(x):
    return jnp.where(x > 0, x, LRELU_SLOPE * x)


def _resblock2_kernel(x_ref, w1_ref, b1_ref, w2_ref, b2_ref, o_ref,
                      *, seq_len, t_tile, d1, d2):
    """One (batch, time-tile) grid step.

    x_ref : (1, 1, C, W)  input window, W = t_tile + 2*(d1+d2), f32
    w*_ref: (C, 3*C)      im2col'ed conv weights (tap-major blocks on axis 1)
    b*_ref: (C, 1)        conv biases (f32)
    o_ref : (1, C, t_tile)
    """
    ext = t_tile + 2 * d2                      # conv1 needed on a +-d2 fringe

    xw = x_ref[0, 0]                           # (C, W) f32

    # ---- conv #1 (dilation d1) over the extended region: one im2col matmul ----
    a0 = _leaky_relu(xw)
    col1 = jnp.concatenate(
        [a0[:, k * d1: k * d1 + ext] for k in range(KERNEL_SIZE)], axis=0)   # (3C, ext)
    w1 = w1_ref[...]
    y1 = jnp.dot(w1, col1.astype(w1.dtype),
                 preferred_element_type=jnp.float32) + b1_ref[...]
    x1 = y1 + xw[:, d1: d1 + ext]              # residual add in f32

    # ---- sequence-boundary mask: outside [0, seq_len) the input of conv #2
    #      must be the Conv1d zero padding, not conv#1's bias/taps.
    g0 = pl.program_id(1) * t_tile
    pos = g0 - d2 + jax.lax.broadcasted_iota(jnp.int32, (1, ext), 1)
    valid = jnp.logical_and(pos >= 0, pos < seq_len)
    a1 = jnp.where(valid, _leaky_relu(x1), 0.0)

    # ---- conv #2 (dilation d2) over the tile: one im2col matmul ----
    col2 = jnp.concatenate(
        [a1[:, k * d2: k * d2 + t_tile] for k in range(KERNEL_SIZE)], axis=0)  # (3C, t_tile)
    w2 = w2_ref[...]
    y2 = jnp.dot(w2, col2.astype(w2.dtype),
                 preferred_element_type=jnp.float32) + b2_ref[...]
    out = y2 + x1[:, d2: d2 + t_tile]          # residual add in f32

    o_ref[0] = out.astype(o_ref.dtype)


def _pick_time_tile(channels):
    # Per time-column VMEM footprint (bytes): 2x double-buffered f32 input
    # window + 2x double-buffered output + ~12 f32-sized temporaries
    # (a0, col1/col2 (3C each), x1, a1, y1/y2, out).  A ~24 MiB tile budget plus
    # weights stays well under the 48 MiB limit we request (v7x has 64 MiB).
    per_col = channels * 16 * 4
    tile = (24 * 1024 * 1024) // max(per_col, 1)
    return int(max(128, min(8192, (tile // 128) * 128)))


@functools.partial(jax.jit, static_argnames=("matmul_dtype", "time_tile"))
def resblock2_pallas(x_nct, weights, biases, *,
                     matmul_dtype=jnp.float32, time_tile=None):
    """ResBlock2 forward.

    x_nct     : (B, C, T) float32, PyTorch NCT layout (kept end-to-end).
    weights[i]: (C_out, C_in, K) weight-normed Conv1d weights, K == 3.
    biases[i] : (C,)
    """
    B, C, T = x_nct.shape
    d1, d2 = DILATIONS
    halo = d1 + d2                                   # chained-conv halo (= 4)

    tt = _pick_time_tile(C) if time_tile is None else int(time_tile)
    if T <= tt:
        t_tile, n_tiles = T, 1
    else:
        t_tile = max(128, (tt // 128) * 128)         # lane-dense output blocks
        n_tiles = -(-T // t_tile)
    t_grid = t_tile * n_tiles
    win = t_tile + 2 * halo

    # Zero-pad once (covers conv1's 'same' padding and the tile halos) and lay
    # the overlapping per-tile windows out contiguously so plain BlockSpecs give
    # fully pipelined, double-buffered DMA (no in-kernel concat-with-zeros).
    xp = jnp.pad(x_nct, ((0, 0), (0, 0), (halo, t_grid - T + halo)))
    xw = jnp.stack(
        [jax.lax.slice_in_dim(xp, j * t_tile, j * t_tile + win, axis=2)
         for j in range(n_tiles)], axis=1)           # (B, n_tiles, C, win)

    # im2col weights: (C_out, C_in, K) -> (C_out, K*C_in), tap-major blocks.
    def prep_w(w):
        return jnp.concatenate(
            [w[:, :, k] for k in range(KERNEL_SIZE)], axis=1).astype(matmul_dtype)

    w1, w2 = prep_w(weights[0]), prep_w(weights[1])
    b1 = biases[0].reshape(C, 1).astype(jnp.float32)
    b2 = biases[1].reshape(C, 1).astype(jnp.float32)

    kernel = functools.partial(_resblock2_kernel, seq_len=T, t_tile=t_tile,
                               d1=d1, d2=d2)

    out = pl.pallas_call(
        kernel,
        out_shape=jax.ShapeDtypeStruct((B, C, t_grid), x_nct.dtype),
        grid=(B, n_tiles),
        in_specs=[
            pl.BlockSpec((1, 1, C, win), lambda b, j: (b, j, 0, 0)),
            pl.BlockSpec((C, KERNEL_SIZE * C), lambda b, j: (0, 0)),
            pl.BlockSpec((C, 1), lambda b, j: (0, 0)),
            pl.BlockSpec((C, KERNEL_SIZE * C), lambda b, j: (0, 0)),
            pl.BlockSpec((C, 1), lambda b, j: (0, 0)),
        ],
        out_specs=pl.BlockSpec((1, C, t_tile), lambda b, j: (b, 0, j)),
        compiler_params=pltpu.CompilerParams(
            dimension_semantics=("parallel", "parallel"),
            vmem_limit_bytes=48 * 1024 * 1024),
    )(xw, w1, b1, w2, b2)

    return out if t_grid == T else out[:, :, :T]


def _make_params(key, channels):
    """Deterministic synthetic params mimicking weight_norm(Conv1d(C, C, 3))."""
    ws, bs = [], []
    for _ in range(2):
        kv, kg, kb, key = jax.random.split(key, 4)
        v = jax.random.normal(kv, (channels, channels, KERNEL_SIZE),
                              jnp.float32) * 0.01
        g = 1.0 + 0.1 * jax.random.normal(kg, (channels, 1, 1), jnp.float32)
        norm = jnp.sqrt(jnp.sum(v * v, axis=(1, 2), keepdims=True)) + 1e-12
        w = g * v / norm
        b = 0.01 * jax.random.normal(kb, (channels,), jnp.float32)
        ws.append(w)
        bs.append(b)
    return ws, bs


def _reference(x_nct, weights, biases):
    """Pure-JAX reference of ResBlock2.forward (NCT layout, like PyTorch)."""
    x = x_nct
    for w, b, d in zip(weights, biases, DILATIONS):
        xt = jnp.where(x > 0, x, LRELU_SLOPE * x)
        xt = jax.lax.conv_general_dilated(
            xt, w, window_strides=(1,), padding=[(d, d)],
            rhs_dilation=(d,), dimension_numbers=("NCH", "OIH", "NCH"))
        xt = xt + b[None, :, None]
        x = xt + x
    return x


if __name__ == "__main__":
    key = jax.random.PRNGKey(0)

    # (B, C, T, forced time_tile): single-tile path, exact-multiple tiling, and
    # ragged-T tiling exercising the halo + sequence-boundary mask.
    cases = [(2, 8, 32, None), (2, 16, 256, 128), (2, 16, 300, 128)]
    for (B, C, T, tt) in cases:
        key, kx, kp = jax.random.split(key, 3)
        x = jax.random.normal(kx, (B, C, T), jnp.float32)
        weights, biases = _make_params(kp, C)
        ref = _reference(x, weights, biases)

        out = jax.block_until_ready(
            resblock2_pallas(x, weights, biases, time_tile=tt))
        assert out.shape == ref.shape == (B, C, T)
        err = float(jnp.max(jnp.abs(out - ref)))
        assert err < 1e-4, f"f32 mismatch {err} at {(B, C, T, tt)}"

        # bf16 matmul operands (f32 accumulation / bias / residual).
        out_bf = jax.block_until_ready(
            resblock2_pallas(x, weights, biases,
                             matmul_dtype=jnp.bfloat16, time_tile=tt))
        err_bf = float(jnp.max(jnp.abs(out_bf - ref)))
        assert err_bf < 5e-2, f"bf16 mismatch {err_bf} at {(B, C, T, tt)}"

    print("KERNEL_OK")
</pallas_src>

<mosaic_0001>
module attributes {stable_mosaic.version = 11 : i64} {
  func.func @_resblock2_kernel(%arg0: i32, %arg1: i32, %arg2: memref<1x1x8x40xf32, #tpu.memory_space<vmem>>, %arg3: memref<8x24xf32, #tpu.memory_space<vmem>>, %arg4: memref<8x1xf32, #tpu.memory_space<vmem>>, %arg5: memref<8x24xf32, #tpu.memory_space<vmem>>, %arg6: memref<8x1xf32, #tpu.memory_space<vmem>>, %arg7: memref<1x8x32xf32, #tpu.memory_space<vmem>>) attributes {dimension_semantics = [#tpu.dimension_semantics<parallel>, #tpu.dimension_semantics<parallel>], iteration_bounds = array<i64: 2, 1>, scalar_prefetch = 0 : i64, scratch_operands = 0 : i64, tpu.core_type = #tpu.core_type<tc>, window_params = [{transform_indices = @transform_0, window_bounds = array<i64: 1, 1, 8, 40>}, {pipeline_mode = #tpu.pipeline_mode<synchronous>, transform_indices = @transform_1, window_bounds = array<i64: 8, 24>}, {pipeline_mode = #tpu.pipeline_mode<synchronous>, transform_indices = @transform_2, window_bounds = array<i64: 8, 1>}, {pipeline_mode = #tpu.pipeline_mode<synchronous>, transform_indices = @transform_3, window_bounds = array<i64: 8, 24>}, {pipeline_mode = #tpu.pipeline_mode<synchronous>, transform_indices = @transform_4, window_bounds = array<i64: 8, 1>}, {transform_indices = @transform_5, window_bounds = array<i64: 1, 8, 32>}]} {
    %c0 = arith.constant 0 : index
    %c0_0 = arith.constant 0 : index
    %c0_1 = arith.constant 0 : index
    %c0_2 = arith.constant 0 : index
    %0 = vector.load %arg2[%c0, %c0_0, %c0_1, %c0_2] : memref<1x1x8x40xf32, #tpu.memory_space<vmem>>, vector<1x1x8x40xf32>
    %1 = vector.shape_cast %0 : vector<1x1x8x40xf32> to vector<8x40xf32>
    %cst = arith.constant 0.000000e+00 : f32
    %2 = vector.broadcast %cst : f32 to vector<8x40xf32>
    %3 = arith.cmpf ogt, %1, %2 : vector<8x40xf32>
    %cst_3 = arith.constant 1.000000e-01 : f32
    %4 = vector.broadcast %cst_3 : f32 to vector<8x40xf32>
    %5 = arith.mulf %4, %1 : vector<8x40xf32>
    %6 = arith.select %3, %1, %5 : vector<8x40xi1>, vector<8x40xf32>
    %7 = vector.extract_strided_slice %6 {offsets = [0, 0], sizes = [8, 38], strides = [1, 1]} : vector<8x40xf32> to vector<8x38xf32>
    %8 = vector.extract_strided_slice %6 {offsets = [0, 1], sizes = [8, 38], strides = [1, 1]} : vector<8x40xf32> to vector<8x38xf32>
    %9 = vector.extract_strided_slice %6 {offsets = [0, 2], sizes = [8, 38], strides = [1, 1]} : vector<8x40xf32> to vector<8x38xf32>
    %10 = tpu.concatenate %7, %8, %9 in 0 : vector<8x38xf32>, vector<8x38xf32>, vector<8x38xf32> -> vector<24x38xf32>
    %c0_4 = arith.constant 0 : index
    %c0_5 = arith.constant 0 : index
    %11 = vector.load %arg3[%c0_4, %c0_5] : memref<8x24xf32, #tpu.memory_space<vmem>>, vector<8x24xf32>
    %cst_6 = arith.constant dense<0.000000e+00> : vector<8x38xf32>
    %12 = tpu.matmul %11, %10, %cst_6 {dimension_numbers = #tpu.dot_dimension_numbers<[1], [0], [0], [1], [0, 0, 1, 1], [], []>} : vector<8x24xf32>, vector<24x38xf32>, vector<8x38xf32> -> vector<8x38xf32>
    %c0_7 = arith.constant 0 : index
    %c0_8 = arith.constant 0 : index
    %13 = vector.load %arg4[%c0_7, %c0_8] : memref<8x1xf32, #tpu.memory_space<vmem>>, vector<8x1xf32>
    %14 = vector.broadcast %13 : vector<8x1xf32> to vector<8x38xf32>
    %15 = arith.addf %12, %14 : vector<8x38xf32>
    %16 = vector.extract_strided_slice %1 {offsets = [0, 1], sizes = [8, 38], strides = [1, 1]} : vector<8x40xf32> to vector<8x38xf32>
    %17 = arith.addf %15, %16 : vector<8x38xf32>
    %c32_i32 = arith.constant 32 : i32
    %18 = arith.muli %arg1, %c32_i32 : i32
    %c3_i32 = arith.constant 3 : i32
    %19 = arith.subi %18, %c3_i32 : i32
    %20 = tpu.iota {dimensions = array<i32: 1>} : vector<1x38xi32>
    %21 = vector.broadcast %19 : i32 to vector<1x38xi32>
    %22 = arith.addi %21, %20 : vector<1x38xi32>
    %c0_i32 = arith.constant 0 : i32
    %23 = vector.broadcast %c0_i32 : i32 to vector<1x38xi32>
    %24 = arith.cmpi sge, %22, %23 : vector<1x38xi32>
    %c32_i32_9 = arith.constant 32 : i32
    %25 = vector.broadcast %c32_i32_9 : i32 to vector<1x38xi32>
    %26 = arith.cmpi slt, %22, %25 : vector<1x38xi32>
    %27 = arith.andi %24, %26 : vector<1x38xi1>
    %cst_10 = arith.constant 0.000000e+00 : f32
    %28 = vector.broadcast %cst_10 : f32 to vector<8x38xf32>
    %29 = arith.cmpf ogt, %17, %28 : vector<8x38xf32>
    %cst_11 = arith.constant 1.000000e-01 : f32
    %30 = vector.broadcast %cst_11 : f32 to vector<8x38xf32>
    %31 = arith.mulf %30, %17 : vector<8x38xf32>
    %32 = arith.select %29, %17, %31 : vector<8x38xi1>, vector<8x38xf32>
    %cst_12 = arith.constant 0.000000e+00 : f32
    %33 = vector.shape_cast %27 : vector<1x38xi1> to vector<1x38xi1>
    %34 = vector.broadcast %33 : vector<1x38xi1> to vector<8x38xi1>
    %35 = vector.broadcast %cst_12 : f32 to vector<8x38xf32>
    %36 = arith.select %34, %32, %35 : vector<8x38xi1>, vector<8x38xf32>
    %37 = vector.extract_strided_slice %36 {offsets = [0, 0], sizes = [8, 32], strides = [1, 1]} : vector<8x38xf32> to vector<8x32xf32>
    %38 = vector.extract_strided_slice %36 {offsets = [0, 3], sizes = [8, 32], strides = [1, 1]} : vector<8x38xf32> to vector<8x32xf32>
    %39 = vector.extract_strided_slice %36 {offsets = [0, 6], sizes = [8, 32], strides = [1, 1]} : vector<8x38xf32> to vector<8x32xf32>
    %40 = tpu.concatenate %37, %38, %39 in 0 : vector<8x32xf32>, vector<8x32xf32>, vector<8x32xf32> -> vector<24x32xf32>
    %c0_13 = arith.constant 0 : index
    %c0_14 = arith.constant 0 : index
    %41 = vector.load %arg5[%c0_13, %c0_14] : memref<8x24xf32, #tpu.memory_space<vmem>>, vector<8x24xf32>
    %cst_15 = arith.constant dense<0.000000e+00> : vector<8x32xf32>
    %42 = tpu.matmul %41, %40, %cst_15 {dimension_numbers = #tpu.dot_dimension_numbers<[1], [0], [0], [1], [0, 0, 1, 1], [], []>} : vector<8x24xf32>, vector<24x32xf32>, vector<8x32xf32> -> vector<8x32xf32>
    %c0_16 = arith.constant 0 : index
    %c0_17 = arith.constant 0 : index
    %43 = vector.load %arg6[%c0_16, %c0_17] : memref<8x1xf32, #tpu.memory_space<vmem>>, vector<8x1xf32>
    %44 = vector.broadcast %43 : vector<8x1xf32> to vector<8x32xf32>
    %45 = arith.addf %42, %44 : vector<8x32xf32>
    %46 = vector.extract_strided_slice %17 {offsets = [0, 3], sizes = [8, 32], strides = [1, 1]} : vector<8x38xf32> to vector<8x32xf32>
    %47 = arith.addf %45, %46 : vector<8x32xf32>
    %c0_18 = arith.constant 0 : index
    %c0_19 = arith.constant 0 : index
    %c0_20 = arith.constant 0 : index
    %48 = vector.load %arg7[%c0_18, %c0_19, %c0_20] : memref<1x8x32xf32, #tpu.memory_space<vmem>>, vector<1x8x32xf32>
    %49 = vector.shape_cast %48 : vector<1x8x32xf32> to vector<8x32xf32>
    %50 = vector.shape_cast %47 : vector<8x32xf32> to vector<1x8x32xf32>
    tpu.vector_store %arg7[%c0_18, %c0_19, %c0_20], %50 {strides = array<i32>} : memref<1x8x32xf32, #tpu.memory_space<vmem>>, vector<1x8x32xf32>,
    return
  }
  func.func @transform_0(%arg0: i32, %arg1: i32) -> (i32, i32, i32, i32) {
    %c0_i32 = arith.constant 0 : i32
    %c0_i32_0 = arith.constant 0 : i32
    %c0_i32_1 = arith.constant 0 : i32
    return %arg0, %arg1, %c0_i32, %c0_i32_0 : i32, i32, i32, i32
  }
  func.func @transform_1(%arg0: i32, %arg1: i32) -> (i32, i32) {
    %c0_i32 = arith.constant 0 : i32
    %c0_i32_0 = arith.constant 0 : i32
    %c0_i32_1 = arith.constant 0 : i32
    return %c0_i32, %c0_i32_0 : i32, i32
  }
  func.func @transform_2(%arg0: i32, %arg1: i32) -> (i32, i32) {
    %c0_i32 = arith.constant 0 : i32
    %c0_i32_0 = arith.constant 0 : i32
    %c0_i32_1 = arith.constant 0 : i32
    return %c0_i32, %c0_i32_0 : i32, i32
  }
  func.func @transform_3(%arg0: i32, %arg1: i32) -> (i32, i32) {
    %c0_i32 = arith.constant 0 : i32
    %c0_i32_0 = arith.constant 0 : i32
    %c0_i32_1 = arith.constant 0 : i32
    return %c0_i32, %c0_i32_0 : i32, i32
  }
  func.func @transform_4(%arg0: i32, %arg1: i32) -> (i32, i32) {
    %c0_i32 = arith.constant 0 : i32
    %c0_i32_0 = arith.constant 0 : i32
    %c0_i32_1 = arith.constant 0 : i32
    return %c0_i32, %c0_i32_0 : i32, i32
  }
  func.func @transform_5(%arg0: i32, %arg1: i32) -> (i32, i32, i32) {
    %c0_i32 = arith.constant 0 : i32
    %c0_i32_0 = arith.constant 0 : i32
    return %arg0, %c0_i32, %arg1 : i32, i32, i32
  }
}

</mosaic_0001>

<llo_original>
// kernel: resblock2_pallas.1
$region0: #{resblock2_pallas.1}
  #allocation0 [shape = 'u32[]', space=smem, size = 0x4, offset = 0x4, fixed_abs, tag = 'smem constant byte address 0x4 - core index']
  #allocation1 [shape = 'u32[144,128]{1,0:T(1,128)}', space=vmem, size = 0x12000, scoped, tag = 'internal scratch']
  %s0 = inlined_call_operand.vmem [shape: f32[2,1,8,40], index: 0, kind: input, shape index: {}]
  %s1 = inlined_call_operand.vmem [shape: f32[8,24], index: 1, kind: input, shape index: {}]
  %s2 = inlined_call_operand.vmem [shape: f32[8,1], index: 2, kind: input, shape index: {}]
  %s3 = inlined_call_operand.vmem [shape: f32[8,24], index: 3, kind: input, shape index: {}]
  %s4 = inlined_call_operand.vmem [shape: f32[8,1], index: 4, kind: input, shape index: {}]
  %s5 = inlined_call_operand.hbm [shape: f32[2,8,32], index: 5, kind: output, shape index: {}]
  %s6 = sld [smem:[#allocation0]]
  $region53: #{resblock2_pallas.1} parent=0
    _
  %s8 = ssub.s32 1, %s6
  %s9 = scalar_select 0, %s8, %s6
  $region1: #{resblock2_pallas.1} parent=0
    #allocation2 [shape = 'u8[8192]{0}', space=vmem, size = 0x2000, scoped, tag = 'output window, operand 0']
    #allocation3 [shape = 's32[2]{0}', space=sflag, size = 0x8, scoped, tag = 'scoped memory for resblock2_pallas.1']
    %10 = vsyncpa [#allocation3], 0
    %s11 = scalar_lea.sflag [#allocation3], 1
    %12 = vsyncpa %s11, 0
    loop: start=0, step=1, limit=4
    $region2: #{resblock2_pallas.1} parent=1 // loop_pre_header
      _
    $region3: #{resblock2_pallas.1} parent=1 // loop_header
      %s14 = sphi 0, %s18
      %p15 = scmp.ge.s32.totalorder %s14, 4
      %s21 = sphi 0, %s33
      %s22 = sphi 0, %s29
      %s23 = sphi 0, %s21
      %s24 = sphi 0, %s22
      %s25 = sphi 0, %s23
      %s26 = sphi 0, %s24
      %s38 = sphi 0, %s40
      %s41 = sphi 0, %s38
      %s42 = sphi 0, %s41
      %s58 = sphi 0, %s42
      %s62 = sphi 0, %s62
      %s64 = sphi 0, %s62
      %s65 = sphi 0, %s64
      %s79 = sphi 0, %s65
      %s83 = sphi 0, %s83
      %s85 = sphi 0, %s83
      %s86 = sphi 0, %s85
      %s100 = sphi 0, %s86
      %s104 = sphi 0, %s104
      %s106 = sphi 0, %s104
      %s107 = sphi 0, %s106
      %s121 = sphi 0, %s107
      %s125 = sphi 0, %s125
      %s127 = sphi 0, %s125
      %s128 = sphi 0, %s127
      %s142 = sphi 0, %s128
      %s150 = sphi 0, %s152
      %s153 = sphi 0, %s150
      %s154 = sphi 0, %s153
      %s170 = sphi 0, %s154
    $region4: #{resblock2_pallas.1} parent=1 // loop_header_branch
      %17 = sbr.rel (%p15) target = $region8
    $region5: #{resblock2_pallas.1} parent=1 // loop_body
      %s19 = ssub.s32 %s14, 1
      %s20 = ssub.s32 %s14, 2
      %s27 = sadd.s32 1, %s22
      %p28 = scmp.ge.s32.totalorder %s27, 1
      %s29 = scalar_select %p28, 0, %s27
      %s30 = sadd.s32 1, %s21
      %s31 = scalar_select %p28, %s30, %s21
      %p32 = scmp.ge.s32.totalorder %s31, 2
      %s33 = scalar_select %p32, 0, %s31
      %s34 = ssub.s32 %s21, %s33
      %s35 = ssub.s32 %s22, %s29
      %s36 = sor.u32 %s34, %s35
      %p37 = scmp.eq.s32.totalorder %s36, 0
      %s39 = sadd.s32 %s38, 1
      %s40 = scalar_select %p37, %s38, %s39
      %p43 = pneg %p37
      %p44 = scmp.eq.s32.totalorder %s14, 1
      %p45 = por %p43, %p44
      %p46 = scmp.ne.s32.totalorder %s38, %s41
      %p47 = scmp.eq.s32.totalorder %s14, 0
      %p48 = por %p46, %p47
      %p49 = scmp.ne.s32.totalorder %s38, %s41
      %p50 = scmp.eq.s32.totalorder %s19, 1
      %p51 = por %p49, %p50
      %p52 = scmp.ne.s32.totalorder %s41, %s42
      %p53 = scmp.eq.s32.totalorder %s19, 0
      %p54 = por %p52, %p53
      %p55 = scmp.ne.s32.totalorder %s41, %s42
      %p56 = scmp.eq.s32.totalorder %s20, 1
      %p57 = por %p55, %p56
      %p59 = scmp.ne.s32.totalorder %s42, %s58
      %p60 = scmp.eq.s32.totalorder %s20, 0
      %p61 = por %p59, %p60
      %s63 = sadd.s32 %s62, 1
      %p66 = scmp.eq.s32.totalorder %s14, 1
      %p67 = scmp.ne.s32.totalorder %s62, %s64
      %p68 = scmp.eq.s32.totalorder %s14, 0
      %p69 = por %p67, %p68
      %p70 = scmp.ne.s32.totalorder %s62, %s64
      %p71 = scmp.eq.s32.totalorder %s19, 1
      %p72 = por %p70, %p71
      %p73 = scmp.ne.s32.totalorder %s64, %s65
      %p74 = scmp.eq.s32.totalorder %s19, 0
      %p75 = por %p73, %p74
      %p76 = scmp.ne.s32.totalorder %s64, %s65
      %p77 = scmp.eq.s32.totalorder %s20, 1
      %p78 = por %p76, %p77
      %p80 = scmp.ne.s32.totalorder %s65, %s79
      %p81 = scmp.eq.s32.totalorder %s20, 0
      %p82 = por %p80, %p81
      %s84 = sadd.s32 %s83, 1
      %p87 = scmp.eq.s32.totalorder %s14, 1
      %p88 = scmp.ne.s32.totalorder %s83, %s85
      %p89 = scmp.eq.s32.totalorder %s14, 0
      %p90 = por %p88, %p89
      %p91 = scmp.ne.s32.totalorder %s83, %s85
      %p92 = scmp.eq.s32.totalorder %s19, 1
      %p93 = por %p91, %p92
      %p94 = scmp.ne.s32.totalorder %s85, %s86
      %p95 = scmp.eq.s32.totalorder %s19, 0
      %p96 = por %p94, %p95
      %p97 = scmp.ne.s32.totalorder %s85, %s86
      %p98 = scmp.eq.s32.totalorder %s20, 1
      %p99 = por %p97, %p98
      %p101 = scmp.ne.s32.totalorder %s86, %s100
      %p102 = scmp.eq.s32.totalorder %s20, 0
      %p103 = por %p101, %p102
      %s105 = sadd.s32 %s104, 1
      %p108 = scmp.eq.s32.totalorder %s14, 1
      %p109 = scmp.ne.s32.totalorder %s104, %s106
      %p110 = scmp.eq.s32.totalorder %s14, 0
      %p111 = por %p109, %p110
      %p112 = scmp.ne.s32.totalorder %s104, %s106
      %p113 = scmp.eq.s32.totalorder %s19, 1
      %p114 = por %p112, %p113
      %p115 = scmp.ne.s32.totalorder %s106, %s107
      %p116 = scmp.eq.s32.totalorder %s19, 0
      %p117 = por %p115, %p116
      %p118 = scmp.ne.s32.totalorder %s106, %s107
      %p119 = scmp.eq.s32.totalorder %s20, 1
      %p120 = por %p118, %p119
      %p122 = scmp.ne.s32.totalorder %s107, %s121
      %p123 = scmp.eq.s32.totalorder %s20, 0
      %p124 = por %p122, %p123
      %s126 = sadd.s32 %s125, 1
      %p129 = scmp.eq.s32.totalorder %s14, 1
      %p130 = scmp.ne.s32.totalorder %s125, %s127
      %p131 = scmp.eq.s32.totalorder %s14, 0
      %p132 = por %p130, %p131
      %p133 = scmp.ne.s32.totalorder %s125, %s127
      %p134 = scmp.eq.s32.totalorder %s19, 1
      %p135 = por %p133, %p134
      %p136 = scmp.ne.s32.totalorder %s127, %s128
      %p137 = scmp.eq.s32.totalorder %s19, 0
      %p138 = por %p136, %p137
      %p139 = scmp.ne.s32.totalorder %s127, %s128
      %p140 = scmp.eq.s32.totalorder %s20, 1
      %p141 = por %p139, %p140
      %p143 = scmp.ne.s32.totalorder %s128, %s142
      %p144 = scmp.eq.s32.totalorder %s20, 0
      %p145 = por %p143, %p144
      %s146 = ssub.s32 %s21, %s33
      %s147 = ssub.s32 %s22, %s29
      %s148 = sor.u32 %s146, %s147
      %p149 = scmp.eq.s32.totalorder %s148, 0
      %s151 = sadd.s32 %s150, 1
      %s152 = scalar_select %p149, %s150, %s151
      %p155 = pneg %p149
      %p156 = scmp.eq.s32.totalorder %s14, 1
      %p157 = por %p155, %p156
      %p158 = scmp.ne.s32.totalorder %s150, %s153
      %p159 = scmp.eq.s32.totalorder %s14, 0
      %p160 = por %p158, %p159
      %p161 = scmp.ne.s32.totalorder %s150, %s153
      %p162 = scmp.eq.s32.totalorder %s19, 1
      %p163 = por %p161, %p162
      %p164 = scmp.ne.s32.totalorder %s153, %s154
      %p165 = scmp.eq.s32.totalorder %s19, 0
      %p166 = por %p164, %p165
      %p167 = scmp.ne.s32.totalorder %s153, %s154
      %p168 = scmp.eq.s32.totalorder %s20, 1
      %p169 = por %p167, %p168
      %p171 = scmp.ne.s32.totalorder %s154, %s170
      %p172 = scmp.eq.s32.totalorder %s20, 0
      %p173 = por %p171, %p172
      %p174 = scmp.le.s32.totalorder 1, %s14
      %p175 = scmp.lt.s32.totalorder %s14, 3
      %p176 = pnand %p174, %p175
      %p177 = pneg %p176
      // Predicated region
      $region9: #{resblock2_pallas.1} parent=5 // pred_check
        _
      $region10: #{resblock2_pallas.1} parent=5 // pred_check_branch
        %179 = sbr.rel (%p176) target = $region12
      $region11: #{resblock2_pallas.1} parent=5 // pred_region
        %s180 = ssub.s32 %s14, 1
        // Predicated region
        $region13: #{resblock2_pallas.1} parent=11 // pred_check
          %p181 = pneg %p75
        $region14: #{resblock2_pallas.1} parent=11 // pred_check_branch
          %183 = sbr.rel (%p181) target = $region16
        $region15: #{resblock2_pallas.1} parent=11 // pred_region
          _
        $region16: #{resblock2_pallas.1} parent=11 // pred_fallthru
          _
        // Predicated region
        $region17: #{resblock2_pallas.1} parent=11 // pred_check
          %p184 = pneg %p96
        $region18: #{resblock2_pallas.1} parent=11 // pred_check_branch
          %186 = sbr.rel (%p184) target = $region20
        $region19: #{resblock2_pallas.1} parent=11 // pred_region
          _
        $region20: #{resblock2_pallas.1} parent=11 // pred_fallthru
          _
        // Predicated region
        $region21: #{resblock2_pallas.1} parent=11 // pred_check
          %p187 = pneg %p117
        $region22: #{resblock2_pallas.1} parent=11 // pred_check_branch
          %189 = sbr.rel (%p187) target = $region24
        $region23: #{resblock2_pallas.1} parent=11 // pred_region
          _
        $region24: #{resblock2_pallas.1} parent=11 // pred_fallthru
          _
        // Predicated region
        $region25: #{resblock2_pallas.1} parent=11 // pred_check
          %p190 = pneg %p138
        $region26: #{resblock2_pallas.1} parent=11 // pred_check_branch
          %192 = sbr.rel (%p190) target = $region28
        $region27: #{resblock2_pallas.1} parent=11 // pred_region
          _
        $region28: #{resblock2_pallas.1} parent=11 // pred_fallthru
          _
      $region12: #{resblock2_pallas.1} parent=5 // pred_fallthru
        _
      %p193 = scmp.lt.s32.totalorder %s14, 2
      // Predicated region
      $region29: #{resblock2_pallas.1} parent=5 // pred_check
        %p194 = pneg %p193
      $region30: #{resblock2_pallas.1} parent=5 // pred_check_branch
        %196 = sbr.rel (%p194) target = $region32
      $region31: #{resblock2_pallas.1} parent=5 // pred_region
        // Predicated region
        $region33: #{resblock2_pallas.1} parent=31 // pred_check
          %p197 = pneg %p48
        $region34: #{resblock2_pallas.1} parent=31 // pred_check_branch
          %199 = sbr.rel (%p197) target = $region36
        $region35: #{resblock2_pallas.1} parent=31 // pred_region
          %p200 = scmp.lt.s32.totalorder %s21, 1
          %s201 = scalar_select %p200, %s21, 1
          %p202 = scmp.lt.s32.totalorder %s22, 0
          %s203 = scalar_select %p202, %s22, 0
          %s204 = sadd.s32 %s203, %s201
          %s205 = smul.addr %s204, 8
          %s206 = scalar_lea.vmem %s0, %s205
        $region36: #{resblock2_pallas.1} parent=31 // pred_fallthru
          _
      $region32: #{resblock2_pallas.1} parent=5 // pred_fallthru
        _
      %p207 = scmp.le.s32.totalorder 1, %s14
      %p208 = scmp.lt.s32.totalorder %s14, 3
      %p209 = pnand %p207, %p208
      %p210 = pneg %p209
      // Predicated region
      $region37: #{resblock2_pallas.1} parent=5 // pred_check
        _
      $region38: #{resblock2_pallas.1} parent=5 // pred_check_branch
        %212 = sbr.rel (%p209) target = $region40
      $region39: #{resblock2_pallas.1} parent=5 // pred_region
        %s213 = ssub.s32 %s14, 1
        %p214 = scmp.lt.s32.totalorder %s23, 1
        %s215 = scalar_select %p214, %s23, 1
        %p216 = scmp.lt.s32.totalorder %s24, 0
        %s217 = scalar_select %p216, %s24, 0
        %s218 = sadd.s32 %s217, %s215
        %s219 = smul.addr %s218, 8
        %s220 = scalar_lea.vmem %s0, %s219
        %p221 = pneg %p54
        %p222 = pneg %p51
        %p223 = pneg %p75
        %p224 = pneg %p72
        %p225 = pneg %p96
        %p226 = pneg %p93
        %p227 = pneg %p117
        %p228 = pneg %p114
        %p229 = pneg %p138
        %p230 = pneg %p135
        %p231 = pneg %p166
        %p232 = pneg %p163
        %s233 = sand.u32 %s153, 1
        %s234 = scalar_lea.sflag [#allocation3], %s233
        %s235 = sand.u32 %s153, 1
        %s236 = smul.addr %s235, 8
        %s237 = scalar_lea.vmem [#allocation2], %s236
        %p238 = scmp.lt.s32.totalorder %s23, 1
        %s239 = scalar_select %p238, %s23, 1
        %p240 = scmp.lt.s32.totalorder %s24, 0
        %s241 = scalar_select %p240, %s24, 0
        %s242 = sadd.s32 %s241, %s239
        %s243 = smul.addr %s242, 8
        %s244 = scalar_lea.vmem %s0, %s243
        %v245 = vld [vmem:[%s244] sm:$0xff]
        %vm246 = vcmp.gt.f32.partialorder %v245, 0.0
        %v247 = vmul.f32 %v245, 0.1
        %v248 = vsel %vm246, %v245, %v247
        %250 = vrot.lane.b32.xlu0 %v248, 127
        %v251 = vpop.permute.xlu0 %250
        %253 = vrot.lane.b32.xlu0 %v248, 126
        %v254 = vpop.permute.xlu0 %253
        %v256 = vld [vmem:[%s1] sm:$0xff]
        %v257 = vld [vmem:[%s2] sm:$0xff]
        %259 = vset.pattern.permute.xlu0 0
        %260 = vperm.xlu0 %259, %v257
        %v261 = vpop.permute.xlu0 %260
        %vm263 = vcmask 195584
        %v265 = vsel %vm263, %v256, 0
        %267 = vmatprep.subr.mxu0 0.0
        %268 = vmatpush1.msra.mxu0 0.0
        %269 = vmatprep.subr.mxu0 0.0
        %270 = vmatpush1.msra.mxu0 0.0
        %271 = vmatprep.subr.mxu0 0.0
        %272 = vmatpush1.msra.mxu0 0.0
        %273 = vmatprep.subr.mxu0 0.0
        %274 = vmatpush1.msra.mxu0 0.0
        %275 = vmatprep.subr.mxu0 0.0
        %276 = vmatpush1.msra.mxu0 0.0
        %277 = vmatprep.subr.mxu0 0.0
        %278 = vmatpush1.msra.mxu0 0.0
        %279 = vmatprep.subr.mxu0 0.0
        %280 = vmatpush1.msra.mxu0 0.0
        %281 = vmatprep.subr.mxu0 0.0
        %282 = vmatpush1.msra.mxu0 0.0
        %283 = vmatprep.subr.mxu0 0.0
        %284 = vmatpush1.msra.mxu0 0.0
        %285 = vmatprep.subr.mxu0 0.0
        %286 = vmatpush1.msra.mxu0 0.0
        %287 = vmatprep.subr.mxu0 0.0
        %288 = vmatpush1.msra.mxu0 0.0
        %289 = vmatprep.subr.mxu0 0.0
        %290 = vmatpush1.msra.mxu0 0.0
        %291 = vmatprep.subr.mxu0 0.0
        %292 = vmatpush1.msra.mxu0 0.0
        %293 = vmatprep.subr.mxu0 0.0
        %294 = vmatpush1.msra.mxu0 %v254
        %295 = vmatprep.subr.mxu0 0.0
        %296 = vmatpush1.msra.mxu0 %v251
        %297 = vmatprep.subr.mxu0 0.0
        %298 = vmatpush1.msra.mxu0 %v248
        %299 = vmatprep.subr.mxu0 0.0
        %300 = vmatpush2.msra.mxu0 0.0
        %301 = vmatprep.subr.mxu0 0.0
        %302 = vmatpush2.msra.mxu0 0.0
        %303 = vmatprep.subr.mxu0 0.0
        %304 = vmatpush2.msra.mxu0 0.0
        %305 = vmatprep.subr.mxu0 0.0
        %306 = vmatpush2.msra.mxu0 0.0
        %307 = vmatprep.subr.mxu0 0.0
        %308 = vmatpush2.msra.mxu0 0.0
        %309 = vmatprep.subr.mxu0 0.0
        %310 = vmatpush2.msra.mxu0 0.0
        %311 = vmatprep.subr.mxu0 0.0
        %312 = vmatpush2.msra.mxu0 0.0
        %313 = vmatprep.subr.mxu0 0.0
        %314 = vmatpush2.msra.mxu0 0.0
        %315 = vmatprep.subr.mxu0 0.0
        %316 = vmatpush2.msra.mxu0 0.0
        %317 = vmatprep.subr.mxu0 0.0
        %318 = vmatpush2.msra.mxu0 0.0
        %319 = vmatprep.subr.mxu0 0.0
        %320 = vmatpush2.msra.mxu0 0.0
        %321 = vmatprep.subr.mxu0 0.0
        %322 = vmatpush2.msra.mxu0 0.0
        %323 = vmatprep.subr.mxu0 0.0
        %324 = vmatpush2.msra.mxu0 0.0
        %325 = vmatprep.subr.mxu0 0.0
        %326 = vmatpush2.msra.mxu0 0.0
        %327 = vmatprep.subr.mxu0 0.0
        %328 = vmatpush2.msra.mxu0 0.0
        %329 = vmatprep.subr.mxu0 0.0
        %330 = vmatpush2.msra.mxu0 0.0
        %331 = vmatprep.mubr.f32.mxu0 0.0
        %332 = vmatmul.mubr.f32.gmra.mxu0 %v265
        %v333 = vpop.f32.mrf.mxu0
        %v334 = vadd.f32 %v261, %v333
        %v335 = vpop.f32.mrf.mxu0
        %336 = vdwg.mxu0
        %338 = vrot.lane.b32.xlu0 %v245, 127
        %v339 = vpop.permute.xlu0 %338
        %v341 = vadd.f32 %v334, %v339
        %s342 = smul.u32 %s24, 32
        %s343 = ssub.s32 %s342, 3
        %v344 = vlaneseq
        %v345 = vand.u32 %v344, 127
        %v346 = vstv %s343
        %v347 = vadd.s32 %v346, %v345
        %vm348 = vcmp.ge.s32.totalorder %v347, 0
        %vm349 = vcmp.lt.s32.totalorder %v347, 32
        %vm350 = vmand %vm348, %vm349
        %vm351 = vcmp.gt.f32.partialorder %v341, 0.0
        %v352 = vmul.f32 %v341, 0.1
        %v353 = vsel %vm351, %v341, %v352
        %v354 = vsel %vm350, 1, 0
        %vm355 = vcmp.eq.s32.totalorder %v354, 1
        %v356 = vsel %vm355, %v353, 0.0
        %358 = vrot.lane.b32.xlu0 %v356, 125
        %v359 = vpop.permute.xlu0 %358
        %361 = vrot.lane.b32.xlu0 %v356, 122
        %v362 = vpop.permute.xlu0 %361
        %v364 = vld [vmem:[%s3] sm:$0xff]
        %v365 = vld [vmem:[%s4] sm:$0xff]
        %367 = vset.pattern.permute.xlu0 0
        %368 = vperm.xlu0 %367, %v365
        %v369 = vpop.permute.xlu0 %368
        %v372 = vsel %vm263, %v364, 0
        %374 = vmatprep.subr.mxu0 0.0
        %375 = vmatpush1.msra.mxu0 0.0
        %376 = vmatprep.subr.mxu0 0.0
        %377 = vmatpush1.msra.mxu0 0.0
        %378 = vmatprep.subr.mxu0 0.0
        %379 = vmatpush1.msra.mxu0 0.0
        %380 = vmatprep.subr.mxu0 0.0
        %381 = vmatpush1.msra.mxu0 0.0
        %382 = vmatprep.subr.mxu0 0.0
        %383 = vmatpush1.msra.mxu0 0.0
        %384 = vmatprep.subr.mxu0 0.0
        %385 = vmatpush1.msra.mxu0 0.0
        %386 = vmatprep.subr.mxu0 0.0
        %387 = vmatpush1.msra.mxu0 0.0
        %388 = vmatprep.subr.mxu0 0.0
        %389 = vmatpush1.msra.mxu0 0.0
        %390 = vmatprep.subr.mxu0 0.0
        %391 = vmatpush1.msra.mxu0 0.0
        %392 = vmatprep.subr.mxu0 0.0
        %393 = vmatpush1.msra.mxu0 0.0
        %394 = vmatprep.subr.mxu0 0.0
        %395 = vmatpush1.msra.mxu0 0.0
        %396 = vmatprep.subr.mxu0 0.0
        %397 = vmatpush1.msra.mxu0 0.0
        %398 = vmatprep.subr.mxu0 0.0
        %399 = vmatpush1.msra.mxu0 0.0
        %400 = vmatprep.subr.mxu0 0.0
        %401 = vmatpush1.msra.mxu0 %v362
        %402 = vmatprep.subr.mxu0 0.0
        %403 = vmatpush1.msra.mxu0 %v359
        %404 = vmatprep.subr.mxu0 0.0
        %405 = vmatpush1.msra.mxu0 %v356
        %406 = vmatprep.subr.mxu0 0.0
        %407 = vmatpush2.msra.mxu0 0.0
        %408 = vmatprep.subr.mxu0 0.0
        %409 = vmatpush2.msra.mxu0 0.0
        %410 = vmatprep.subr.mxu0 0.0
        %411 = vmatpush2.msra.mxu0 0.0
        %412 = vmatprep.subr.mxu0 0.0
        %413 = vmatpush2.msra.mxu0 0.0
        %414 = vmatprep.subr.mxu0 0.0
        %415 = vmatpush2.msra.mxu0 0.0
        %416 = vmatprep.subr.mxu0 0.0
        %417 = vmatpush2.msra.mxu0 0.0
        %418 = vmatprep.subr.mxu0 0.0
        %419 = vmatpush2.msra.mxu0 0.0
        %420 = vmatprep.subr.mxu0 0.0
        %421 = vmatpush2.msra.mxu0 0.0
        %422 = vmatprep.subr.mxu0 0.0
        %423 = vmatpush2.msra.mxu0 0.0
        %424 = vmatprep.subr.mxu0 0.0
        %425 = vmatpush2.msra.mxu0 0.0
        %426 = vmatprep.subr.mxu0 0.0
        %427 = vmatpush2.msra.mxu0 0.0
        %428 = vmatprep.subr.mxu0 0.0
        %429 = vmatpush2.msra.mxu0 0.0
        %430 = vmatprep.subr.mxu0 0.0
        %431 = vmatpush2.msra.mxu0 0.0
        %432 = vmatprep.subr.mxu0 0.0
        %433 = vmatpush2.msra.mxu0 0.0
        %434 = vmatprep.subr.mxu0 0.0
        %435 = vmatpush2.msra.mxu0 0.0
        %436 = vmatprep.subr.mxu0 0.0
        %437 = vmatpush2.msra.mxu0 0.0
        %438 = vmatprep.mubr.f32.mxu0 0.0
        %439 = vmatmul.mubr.f32.gmra.mxu0 %v372
        %v440 = vpop.f32.mrf.mxu0
        %v441 = vadd.f32 %v369, %v440
        %v442 = vpop.f32.mrf.mxu0
        %443 = vdwg.mxu0
        %445 = vrot.lane.b32.xlu0 %v341, 125
        %v446 = vpop.permute.xlu0 %445
        %v448 = vadd.f32 %v441, %v446
        %vm449 = vcmask 261120
        %450 = vst.msk [vmem:[%s237] sm:$0xff] %vm449, %v448
        %s451 = sand.u32 %s153, 1
        %s452 = scalar_lea.sflag [#allocation3], %s451
        %s453 = sand.u32 %s153, 1
        %s454 = smul.addr %s453, 8
        %s455 = scalar_lea.vmem [#allocation2], %s454
        // Predicated region
        $region41: #{resblock2_pallas.1} parent=39 // pred_check
          %p456 = pneg %p163
        $region42: #{resblock2_pallas.1} parent=39 // pred_check_branch
          %458 = sbr.rel (%p456) target = $region44
        $region43: #{resblock2_pallas.1} parent=39 // pred_region
          %s460 = ssub.s32 128, 128
          %461 = vsyncadd %s452, %s460
          %s462 = sadd.s32 %s24, %s23
          %s463 = smul.addr %s462, 128
          %s464 = scalar_lea.hbm %s5, %s463
          %s466 = sshll.u32 %s455, 4
          %s467 = int_to_ptr.vmem [resolvable:$true] %s466
          %469 = dma.vmem_to_hbm [thread:$0]  %s467, 128, %s464, %s452
        $region44: #{resblock2_pallas.1} parent=39 // pred_fallthru
          _
      $region40: #{resblock2_pallas.1} parent=5 // pred_fallthru
        _
      %p470 = scmp.le.s32.totalorder 2, %s14
      // Predicated region
      $region45: #{resblock2_pallas.1} parent=5 // pred_check
        %p471 = pneg %p470
      $region46: #{resblock2_pallas.1} parent=5 // pred_check_branch
        %473 = sbr.rel (%p471) target = $region48
      $region47: #{resblock2_pallas.1} parent=5 // pred_region
        %s474 = ssub.s32 %s14, 2
        // Predicated region
        $region49: #{resblock2_pallas.1} parent=47 // pred_check
          %p475 = pneg %p169
        $region50: #{resblock2_pallas.1} parent=47 // pred_check_branch
          %477 = sbr.rel (%p475) target = $region52
        $region51: #{resblock2_pallas.1} parent=47 // pred_region
          %s478 = sand.u32 %s154, 1
          %s479 = scalar_lea.sflag [#allocation3], %s478
          %s480 = sand.u32 %s154, 1
          %s481 = smul.addr %s480, 8
          %s482 = scalar_lea.vmem [#allocation2], %s481
          %483 = dma.done %s479, 128
        $region52: #{resblock2_pallas.1} parent=47 // pred_fallthru
          _
      $region48: #{resblock2_pallas.1} parent=5 // pred_fallthru
        _
    $region6: #{resblock2_pallas.1} parent=1 // loop_footer
      %s18 = sadd.s32 1, %s14
    $region7: #{resblock2_pallas.1} parent=1 // loop_footer_branch
      %13 = sbr.rel target = $region3
    $region8: #{resblock2_pallas.1} parent=1 // loop_exit
      _
    %484 = vsyncpa [#allocation3], 1
    %s485 = scalar_lea.sflag [#allocation3], 1
    %486 = vsyncpa %s485, 1

</llo_original>
